<compile_context>
chip_gen: v5e
topology: v5e:2x2
jax: 0.10.0
libtpu: 0.0.40
codegen_flags: <defaults>
</compile_context>

<pallas_src>
import math

import jax
import jax.numpy as jnp
from jax import lax
from jax.experimental import pallas as pl
from jax.experimental.pallas import tpu as pltpu


def _round_up(a, b):
    return (a + b - 1) // b * b


def _prompt_dists_kernel(x_ref, e_ref, d_ref):
    """d[n, m] = || normalize(x[n]) - normalize(e[m]) ||_2 via the MXU.

    x_ref: (TN, D) f32 in VMEM
    e_ref: (TM, D) f32 in VMEM
    d_ref: (TN, TM) f32 in VMEM (lane-dense: TM is a multiple of 128)
    """
    x = x_ref[...]  # (TN, D)
    e = e_ref[...]  # (TM, D)

    eps = jnp.float32(1e-12)  # matches torch.nn.functional.normalize default

    # Normalize the (few) embed rows up front: broadcast along lanes, no
    # cross-lane transpose needed.  TM*D multiplies, negligible.
    e_norm = jnp.sqrt(jnp.sum(e * e, axis=-1, keepdims=True))      # (TM, 1)
    en = e * (1.0 / jnp.maximum(e_norm, eps))                      # (TM, D)

    # Raw Gram matrix on the MXU: contract D of x against D of en -> (TN, TM).
    # TODO(synk): bf16 operands with f32 accumulation would be faster on
    # v5e/v6e/v7x MXUs but does not hold the 1e-5 forward tolerance; keep f32.
    s = lax.dot_general(
        x, en, (((1,), (1,)), ((), ())), preferred_element_type=jnp.float32
    )                                                              # (TN, TM)

    # Deferred x-row normalization: scale the Gram matrix by inv_nx, which is
    # (TN, 1) and lane-broadcasts into (TN, TM) for free.
    x_norm = jnp.sqrt(jnp.sum(x * x, axis=-1, keepdims=True))      # (TN, 1)
    cos = s * (1.0 / jnp.maximum(x_norm, eps))                     # (TN, TM)

    # ||xn - en||^2 = 2 - 2*cos for unit rows; clamp to [0, 4] so float ulp
    # overshoot (cos slightly > 1) cannot produce NaN in the sqrt.
    d2 = jnp.clip(2.0 - 2.0 * cos, 0.0, 4.0)
    d_ref[...] = jnp.sqrt(d2)


def prompt_pairwise_dists(x, embed, *, tn=256, tm=256):
    """Returns the (N, M) normalized pairwise-distance matrix."""
    x = jnp.asarray(x, jnp.float32)
    embed = jnp.asarray(embed, jnp.float32)
    N, D = x.shape
    M, D2 = embed.shape
    assert D == D2, "input and embed must share the embedding dimension"

    # Tile sizes: sublane-aligned rows for x, lane-dense (multiple of 128)
    # columns for the output.  Capped at 256 so each grid step's working set
    # stays well inside VMEM on every generation (incl. v7x's 64 MiB).
    TN = min(tn, _round_up(N, 8))
    TM = min(tm, _round_up(M, 128))
    N_pad = _round_up(N, TN)
    M_pad = _round_up(M, TM)

    if N_pad != N:
        x = jnp.pad(x, ((0, N_pad - N), (0, 0)))
    if M_pad != M:
        embed = jnp.pad(embed, ((0, M_pad - M), (0, 0)))
    # Padded (zero) rows give cos = 0 -> d = sqrt(2): finite, sliced away.

    d = pl.pallas_call(
        _prompt_dists_kernel,
        out_shape=jax.ShapeDtypeStruct((N_pad, M_pad), jnp.float32),
        grid=(N_pad // TN, M_pad // TM),
        in_specs=[
            pl.BlockSpec((TN, D), lambda i, j: (i, 0)),
            pl.BlockSpec((TM, D), lambda i, j: (j, 0)),
        ],
        out_specs=pl.BlockSpec((TN, TM), lambda i, j: (i, j)),
        compiler_params=pltpu.CompilerParams(
            dimension_semantics=("parallel", "parallel")
        ),
    )(x, embed)

    return d[:N, :M]


def prompt_forward(x, embed, weight=1.0, stop=float("-inf")):
    """Full Prompt.forward (forward value only).

    The N*M*D pairwise-distance hot path runs in the Pallas kernel; the tiny
    (N, M) arcsin/mean epilogue stays in plain JAX.
    """
    d = prompt_pairwise_dists(x, embed)                      # (N, M)

    # TODO(synk): arcsin has no guaranteed Mosaic TPU lowering; the epilogue
    # on the tiny (N, M) result is done in JAX.  Clamp the argument so a
    # d > 2 float ulp cannot produce NaN.
    a = jnp.clip(d * 0.5, 0.0, 1.0)
    dists = 2.0 * jnp.square(jnp.arcsin(a))                  # (N, M)

    w = jnp.asarray(weight, dtype=jnp.float32)
    dists = dists * jnp.sign(w)

    # TODO(synk): ReplaceGrad / `stop` only affect the backward pass; the
    # forward value is unchanged, so they are intentionally not materialized.
    del stop
    return jnp.abs(w) * jnp.mean(dists)


def _prompt_forward_ref(x, embed, weight=1.0):
    """Pure-JAX reference replicating the torch forward exactly."""
    eps = 1e-12
    xn = x / jnp.maximum(
        jnp.linalg.norm(x, axis=-1, keepdims=True), eps)      # (N, D)
    en = embed / jnp.maximum(
        jnp.linalg.norm(embed, axis=-1, keepdims=True), eps)  # (M, D)
    diff = xn[:, None, :] - en[None, :, :]                    # (N, M, D)
    d = jnp.linalg.norm(diff, axis=-1)                        # (N, M)
    dists = 2.0 * jnp.square(jnp.arcsin(d * 0.5))
    w = jnp.asarray(weight, dtype=jnp.float32)
    return jnp.abs(w) * jnp.mean(dists * jnp.sign(w))


if __name__ == "__main__":
    # Small shapes consistent with Prompt's forward:
    #   input: (N, D) batch of cutout embeddings, embed: (M, D) prompt embeds.
    # NOTE: at these toy sizes the pallas_call is overhead-dominated; the
    # kernel is shaped for real (N, M) via the tiled parallel grid above.
    N, M, D = 8, 2, 128

    key = jax.random.PRNGKey(0)
    kx, ke = jax.random.split(key)
    x = jax.random.normal(kx, (N, D), dtype=jnp.float32)
    embed = jax.random.normal(ke, (M, D), dtype=jnp.float32)

    weight = 1.0
    stop = float("-inf")

    out = prompt_forward(x, embed, weight, stop)
    out = jax.block_until_ready(out)

    ref = jax.block_until_ready(_prompt_forward_ref(x, embed, weight))
    assert out.shape == () and out.dtype == jnp.float32
    assert abs(float(out) - float(ref)) < 1e-5, (float(out), float(ref))

    print("KERNEL_OK")
</pallas_src>

<mosaic_0001>
module attributes {stable_mosaic.version = 11 : i64} {
  func.func @_prompt_dists_kernel(%arg0: i32, %arg1: i32, %arg2: memref<8x128xf32, #tpu.memory_space<vmem>>, %arg3: memref<128x128xf32, #tpu.memory_space<vmem>>, %arg4: memref<8x128xf32, #tpu.memory_space<vmem>>) attributes {dimension_semantics = [#tpu.dimension_semantics<parallel>, #tpu.dimension_semantics<parallel>], iteration_bounds = array<i64: 1, 1>, scalar_prefetch = 0 : i64, scratch_operands = 0 : i64, tpu.core_type = #tpu.core_type<tc>, window_params = [{transform_indices = @transform_0, window_bounds = array<i64: 8, 128>}, {transform_indices = @transform_1, window_bounds = array<i64: 128, 128>}, {transform_indices = @transform_2, window_bounds = array<i64: 8, 128>}]} {
    %c0 = arith.constant 0 : index
    %c0_0 = arith.constant 0 : index
    %0 = vector.load %arg2[%c0, %c0_0] : memref<8x128xf32, #tpu.memory_space<vmem>>, vector<8x128xf32>
    %c0_1 = arith.constant 0 : index
    %c0_2 = arith.constant 0 : index
    %1 = vector.load %arg3[%c0_1, %c0_2] : memref<128x128xf32, #tpu.memory_space<vmem>>, vector<128x128xf32>
    %2 = arith.mulf %1, %1 : vector<128x128xf32>
    %cst = arith.constant dense<0.000000e+00> : vector<128xf32>
    %3 = vector.multi_reduction <add>, %2, %cst [1] : vector<128x128xf32> to vector<128xf32>
    %4 = vector.shape_cast %3 : vector<128xf32> to vector<128x1xf32>
    %5 = math.sqrt %4 : vector<128x1xf32>
    %cst_3 = arith.constant 9.99999996E-13 : f32
    %6 = vector.broadcast %cst_3 : f32 to vector<128x1xf32>
    %7 = arith.maximumf %5, %6 : vector<128x1xf32>
    %cst_4 = arith.constant 1.000000e+00 : f32
    %8 = vector.broadcast %cst_4 : f32 to vector<128x1xf32>
    %9 = arith.divf %8, %7 : vector<128x1xf32>
    %10 = vector.broadcast %9 : vector<128x1xf32> to vector<128x128xf32>
    %11 = arith.mulf %1, %10 : vector<128x128xf32>
    %cst_5 = arith.constant dense<0.000000e+00> : vector<8x128xf32>
    %12 = tpu.matmul %0, %11, %cst_5 {dimension_numbers = #tpu.dot_dimension_numbers<[1], [1], [0], [0], [0, 0, 1, 0], [], []>} : vector<8x128xf32>, vector<128x128xf32>, vector<8x128xf32> -> vector<8x128xf32>
    %13 = arith.mulf %0, %0 : vector<8x128xf32>
    %cst_6 = arith.constant dense<0.000000e+00> : vector<8xf32>
    %14 = vector.multi_reduction <add>, %13, %cst_6 [1] : vector<8x128xf32> to vector<8xf32>
    %15 = vector.shape_cast %14 : vector<8xf32> to vector<8x1xf32>
    %16 = math.sqrt %15 : vector<8x1xf32>
    %cst_7 = arith.constant 9.99999996E-13 : f32
    %17 = vector.broadcast %cst_7 : f32 to vector<8x1xf32>
    %18 = arith.maximumf %16, %17 : vector<8x1xf32>
    %cst_8 = arith.constant 1.000000e+00 : f32
    %19 = vector.broadcast %cst_8 : f32 to vector<8x1xf32>
    %20 = arith.divf %19, %18 : vector<8x1xf32>
    %21 = vector.broadcast %20 : vector<8x1xf32> to vector<8x128xf32>
    %22 = arith.mulf %12, %21 : vector<8x128xf32>
    %cst_9 = arith.constant 2.000000e+00 : f32
    %23 = vector.broadcast %cst_9 : f32 to vector<8x128xf32>
    %24 = arith.mulf %23, %22 : vector<8x128xf32>
    %cst_10 = arith.constant 2.000000e+00 : f32
    %25 = vector.broadcast %cst_10 : f32 to vector<8x128xf32>
    %26 = arith.subf %25, %24 : vector<8x128xf32>
    %cst_11 = arith.constant 0.000000e+00 : f32
    %cst_12 = arith.constant 4.000000e+00 : f32
    %27 = vector.broadcast %cst_11 : f32 to vector<8x128xf32>
    %28 = arith.maximumf %27, %26 : vector<8x128xf32>
    %29 = vector.broadcast %cst_12 : f32 to vector<8x128xf32>
    %30 = arith.minimumf %29, %28 : vector<8x128xf32>
    %31 = math.sqrt %30 : vector<8x128xf32>
    %c0_13 = arith.constant 0 : index
    %c0_14 = arith.constant 0 : index
    %32 = vector.load %arg4[%c0_13, %c0_14] : memref<8x128xf32, #tpu.memory_space<vmem>>, vector<8x128xf32>
    tpu.vector_store %arg4[%c0_13, %c0_14], %31 {strides = array<i32>} : memref<8x128xf32, #tpu.memory_space<vmem>>, vector<8x128xf32>,
    return
  }
  func.func @transform_0(%arg0: i32, %arg1: i32) -> (i32, i32) {
    %c0_i32 = arith.constant 0 : i32
    %c0_i32_0 = arith.constant 0 : i32
    return %arg0, %c0_i32 : i32, i32
  }
  func.func @transform_1(%arg0: i32, %arg1: i32) -> (i32, i32) {
    %c0_i32 = arith.constant 0 : i32
    %c0_i32_0 = arith.constant 0 : i32
    return %arg1, %c0_i32 : i32, i32
  }
  func.func @transform_2(%arg0: i32, %arg1: i32) -> (i32, i32) {
    %c0_i32 = arith.constant 0 : i32
    return %arg0, %arg1 : i32, i32
  }
}

</mosaic_0001>

<llo_original>
// kernel: tpu_custom_call.1
$region0: #{tpu_custom_call.1}
  #allocation0 [shape = 'u32[]', space=smem, size = 0x4, offset = 0x4, fixed_abs, tag = 'smem constant byte address 0x4 - core index']
  #allocation1 [shape = 'u32[72,128]{1,0:T(1,128)}', space=vmem, size = 0x9000, scoped, tag = 'internal scratch']
  %s0 = inlined_call_operand.hbm [shape: f32[8,128], index: 0, kind: input, shape index: {}]
  %s1 = inlined_call_operand.hbm [shape: f32[128,128], index: 1, kind: input, shape index: {}]
  %s2 = inlined_call_operand.hbm [shape: f32[8,128], index: 2, kind: output, shape index: {}]
  %s3 = sld [smem:[#allocation0]]
  $region26: #{tpu_custom_call.1} parent=0
    _
  %s5 = ssub.s32 1, %s3
  %s6 = scalar_select 0, %s5, %s3
  $region1: #{tpu_custom_call.1} parent=0
    #allocation2 [shape = 'u8[4096]{0}', space=vmem, size = 0x1000, scoped, tag = 'input window, operand 0, single buffered']
    #allocation3 [shape = 's32[1]{0}', space=sflag, size = 0x4, scoped, tag = 'scoped memory for tpu_custom_call.1']
    #allocation4 [shape = 's32[1]{0}', space=sflag, size = 0x4, scoped, tag = 'scoped memory for tpu_custom_call.1']
    #allocation5 [shape = 'u8[65536]{0}', space=vmem, size = 0x10000, scoped, tag = 'input window, operand 1, single buffered']
    #allocation6 [shape = 's32[1]{0}', space=sflag, size = 0x4, scoped, tag = 'scoped memory for tpu_custom_call.1']
    #allocation7 [shape = 'u8[4096]{0}', space=vmem, size = 0x1000, scoped, tag = 'output window, operand 0, single buffered']
    %7 = vsyncpa [#allocation3], 0
    %8 = vsyncpa [#allocation6], 0
    %9 = vsyncpa [#allocation4], 0
    // Predicated region
    $region2: #{tpu_custom_call.1} parent=1 // pred_check
      _
    $region3: #{tpu_custom_call.1} parent=1 // pred_check_branch
      %11 = sbr.rel (0) target = $region5
    $region4: #{tpu_custom_call.1} parent=1 // pred_region
      %13 = vsyncadd [#allocation3], 0
      %s15 = sshll.u32 %s0, 4
      %s16 = int_to_ptr.hbm [resolvable:$true] %s15
      %s17 = sshll.u32 [#allocation2], 4
      %s18 = int_to_ptr.vmem [resolvable:$true] %s17
      %20 = dma.hbm_to_vmem [thread:$0]  %s16, 128, %s18, [#allocation3]
    $region5: #{tpu_custom_call.1} parent=1 // pred_fallthru
      _
    // Predicated region
    $region6: #{tpu_custom_call.1} parent=1 // pred_check
      _
    $region7: #{tpu_custom_call.1} parent=1 // pred_check_branch
      %22 = sbr.rel (0) target = $region9
    $region8: #{tpu_custom_call.1} parent=1 // pred_region
      %24 = vsyncadd [#allocation6], 0
      %s25 = sshll.u32 %s1, 4
      %s26 = int_to_ptr.hbm [resolvable:$true] %s25
      %s27 = sshll.u32 [#allocation5], 4
      %s28 = int_to_ptr.vmem [resolvable:$true] %s27
      %33 = dma.hbm_to_vmem [thread:$0]  %s26, 2048, %s28, [#allocation6], 128, 128, 8
    $region9: #{tpu_custom_call.1} parent=1 // pred_fallthru
      _
    // Predicated region
    $region10: #{tpu_custom_call.1} parent=1 // pred_check
      _
    $region11: #{tpu_custom_call.1} parent=1 // pred_check_branch
      %35 = sbr.rel (0) target = $region13
    $region12: #{tpu_custom_call.1} parent=1 // pred_region
      %37 = dma.done [#allocation3], 128
    $region13: #{tpu_custom_call.1} parent=1 // pred_fallthru
      _
    // Predicated region
    $region14: #{tpu_custom_call.1} parent=1 // pred_check
      _
    $region15: #{tpu_custom_call.1} parent=1 // pred_check_branch
      %39 = sbr.rel (0) target = $region17
    $region16: #{tpu_custom_call.1} parent=1 // pred_region
      %41 = dma.done [#allocation6], 2048
    $region17: #{tpu_custom_call.1} parent=1 // pred_fallthru
      _
    %v42 = vld [vmem:[#allocation2] sm:$0xff]
    %v43 = vld [vmem:[#allocation5] sm:$0xff]
    %v44 = vld [vmem:[#allocation5 + $0x8] sm:$0xff]
    %v45 = vld [vmem:[#allocation5 + $0x10] sm:$0xff]
    %v46 = vld [vmem:[#allocation5 + $0x18] sm:$0xff]
    %v47 = vld [vmem:[#allocation5 + $0x20] sm:$0xff]
    %v48 = vld [vmem:[#allocation5 + $0x28] sm:$0xff]
    %v49 = vld [vmem:[#allocation5 + $0x30] sm:$0xff]
    %v50 = vld [vmem:[#allocation5 + $0x38] sm:$0xff]
    %v51 = vld [vmem:[#allocation5 + $0x40] sm:$0xff]
    %v52 = vld [vmem:[#allocation5 + $0x48] sm:$0xff]
    %v53 = vld [vmem:[#allocation5 + $0x50] sm:$0xff]
    %v54 = vld [vmem:[#allocation5 + $0x58] sm:$0xff]
    %v55 = vld [vmem:[#allocation5 + $0x60] sm:$0xff]
    %v56 = vld [vmem:[#allocation5 + $0x68] sm:$0xff]
    %v57 = vld [vmem:[#allocation5 + $0x70] sm:$0xff]
    %v58 = vld [vmem:[#allocation5 + $0x78] sm:$0xff]
    %v59 = vmul.f32 %v43, %v43
    %v60 = vmul.f32 %v44, %v44
    %v61 = vmul.f32 %v45, %v45
    %v62 = vmul.f32 %v46, %v46
    %v63 = vmul.f32 %v47, %v47
    %v64 = vmul.f32 %v48, %v48
    %v65 = vmul.f32 %v49, %v49
    %v66 = vmul.f32 %v50, %v50
    %v67 = vmul.f32 %v51, %v51
    %v68 = vmul.f32 %v52, %v52
    %v69 = vmul.f32 %v53, %v53
    %v70 = vmul.f32 %v54, %v54
    %v71 = vmul.f32 %v55, %v55
    %v72 = vmul.f32 %v56, %v56
    %v73 = vmul.f32 %v57, %v57
    %v74 = vmul.f32 %v58, %v58
    %75 = vadd.xlane.f32.xlu0 %v59
    %v76 = vpop.xlane.xlu0 %75
    %77 = vadd.xlane.f32.xlu0 %v60
    %v78 = vpop.xlane.xlu0 %77
    %79 = vadd.xlane.f32.xlu0 %v61
    %v80 = vpop.xlane.xlu0 %79
    %81 = vadd.xlane.f32.xlu0 %v62
    %v82 = vpop.xlane.xlu0 %81
    %83 = vadd.xlane.f32.xlu0 %v63
    %v84 = vpop.xlane.xlu0 %83
    %85 = vadd.xlane.f32.xlu0 %v64
    %v86 = vpop.xlane.xlu0 %85
    %87 = vadd.xlane.f32.xlu0 %v65
    %v88 = vpop.xlane.xlu0 %87
    %89 = vadd.xlane.f32.xlu0 %v66
    %v90 = vpop.xlane.xlu0 %89
    %91 = vadd.xlane.f32.xlu0 %v67
    %v92 = vpop.xlane.xlu0 %91
    %93 = vadd.xlane.f32.xlu0 %v68
    %v94 = vpop.xlane.xlu0 %93
    %95 = vadd.xlane.f32.xlu0 %v69
    %v96 = vpop.xlane.xlu0 %95
    %97 = vadd.xlane.f32.xlu0 %v70
    %v98 = vpop.xlane.xlu0 %97
    %99 = vadd.xlane.f32.xlu0 %v71
    %v100 = vpop.xlane.xlu0 %99
    %101 = vadd.xlane.f32.xlu0 %v72
    %v102 = vpop.xlane.xlu0 %101
    %103 = vadd.xlane.f32.xlu0 %v73
    %v104 = vpop.xlane.xlu0 %103
    %105 = vadd.xlane.f32.xlu0 %v74
    %v106 = vpop.xlane.xlu0 %105
    %v107 = vrsqrt.pop %v76
    %v108 = vmul.f32 %v107, %v76
    %v109 = vmul.f32 %v108, %v107
    %v110 = vmul.f32 0.5, %v109
    %v111 = vsub.f32 1.5, %v110
    %v112 = vmul.f32 %v107, %v111
    %v113 = vmul.f32 %v76, %v112
    %vm114 = vcmp.eq.f32.partialorder %v76, inf
    %v115 = vsel %vm114, %v76, %v113
    %vm116 = vcmp.eq.f32.partialorder %v76, 0.0
    %v117 = vand.u32 %v76, 2147483648
    %v118 = vsel %vm116, %v117, %v115
    %v119 = vrsqrt.pop %v78
    %v120 = vmul.f32 %v119, %v78
    %v121 = vmul.f32 %v120, %v119
    %v122 = vmul.f32 0.5, %v121
    %v123 = vsub.f32 1.5, %v122
    %v124 = vmul.f32 %v119, %v123
    %v125 = vmul.f32 %v78, %v124
    %vm126 = vcmp.eq.f32.partialorder %v78, inf
    %v127 = vsel %vm126, %v78, %v125
    %vm128 = vcmp.eq.f32.partialorder %v78, 0.0
    %v129 = vand.u32 %v78, 2147483648
    %v130 = vsel %vm128, %v129, %v127
    %v131 = vrsqrt.pop %v80
    %v132 = vmul.f32 %v131, %v80
    %v133 = vmul.f32 %v132, %v131
    %v134 = vmul.f32 0.5, %v133
    %v135 = vsub.f32 1.5, %v134
    %v136 = vmul.f32 %v131, %v135
    %v137 = vmul.f32 %v80, %v136
    %vm138 = vcmp.eq.f32.partialorder %v80, inf
    %v139 = vsel %vm138, %v80, %v137
    %vm140 = vcmp.eq.f32.partialorder %v80, 0.0
    %v141 = vand.u32 %v80, 2147483648
    %v142 = vsel %vm140, %v141, %v139
    %v143 = vrsqrt.pop %v82
    %v144 = vmul.f32 %v143, %v82
    %v145 = vmul.f32 %v144, %v143
    %v146 = vmul.f32 0.5, %v145
    %v147 = vsub.f32 1.5, %v146
    %v148 = vmul.f32 %v143, %v147
    %v149 = vmul.f32 %v82, %v148
    %vm150 = vcmp.eq.f32.partialorder %v82, inf
    %v151 = vsel %vm150, %v82, %v149
    %vm152 = vcmp.eq.f32.partialorder %v82, 0.0
    %v153 = vand.u32 %v82, 2147483648
    %v154 = vsel %vm152, %v153, %v151
    %v155 = vrsqrt.pop %v84
    %v156 = vmul.f32 %v155, %v84
    %v157 = vmul.f32 %v156, %v155
    %v158 = vmul.f32 0.5, %v157
    %v159 = vsub.f32 1.5, %v158
    %v160 = vmul.f32 %v155, %v159
    %v161 = vmul.f32 %v84, %v160
    %vm162 = vcmp.eq.f32.partialorder %v84, inf
    %v163 = vsel %vm162, %v84, %v161
    %vm164 = vcmp.eq.f32.partialorder %v84, 0.0
    %v165 = vand.u32 %v84, 2147483648
    %v166 = vsel %vm164, %v165, %v163
    %v167 = vrsqrt.pop %v86
    %v168 = vmul.f32 %v167, %v86
    %v169 = vmul.f32 %v168, %v167
    %v170 = vmul.f32 0.5, %v169
    %v171 = vsub.f32 1.5, %v170
    %v172 = vmul.f32 %v167, %v171
    %v173 = vmul.f32 %v86, %v172
    %vm174 = vcmp.eq.f32.partialorder %v86, inf
    %v175 = vsel %vm174, %v86, %v173
    %vm176 = vcmp.eq.f32.partialorder %v86, 0.0
    %v177 = vand.u32 %v86, 2147483648
    %v178 = vsel %vm176, %v177, %v175
    %v179 = vrsqrt.pop %v88
    %v180 = vmul.f32 %v179, %v88
    %v181 = vmul.f32 %v180, %v179
    %v182 = vmul.f32 0.5, %v181
    %v183 = vsub.f32 1.5, %v182
    %v184 = vmul.f32 %v179, %v183
    %v185 = vmul.f32 %v88, %v184
    %vm186 = vcmp.eq.f32.partialorder %v88, inf
    %v187 = vsel %vm186, %v88, %v185
    %vm188 = vcmp.eq.f32.partialorder %v88, 0.0
    %v189 = vand.u32 %v88, 2147483648
    %v190 = vsel %vm188, %v189, %v187
    %v191 = vrsqrt.pop %v90
    %v192 = vmul.f32 %v191, %v90
    %v193 = vmul.f32 %v192, %v191
    %v194 = vmul.f32 0.5, %v193
    %v195 = vsub.f32 1.5, %v194
    %v196 = vmul.f32 %v191, %v195
    %v197 = vmul.f32 %v90, %v196
    %vm198 = vcmp.eq.f32.partialorder %v90, inf
    %v199 = vsel %vm198, %v90, %v197
    %vm200 = vcmp.eq.f32.partialorder %v90, 0.0
    %v201 = vand.u32 %v90, 2147483648
    %v202 = vsel %vm200, %v201, %v199
    %v203 = vrsqrt.pop %v92
    %v204 = vmul.f32 %v203, %v92
    %v205 = vmul.f32 %v204, %v203
    %v206 = vmul.f32 0.5, %v205
    %v207 = vsub.f32 1.5, %v206
    %v208 = vmul.f32 %v203, %v207
    %v209 = vmul.f32 %v92, %v208
    %vm210 = vcmp.eq.f32.partialorder %v92, inf
    %v211 = vsel %vm210, %v92, %v209
    %vm212 = vcmp.eq.f32.partialorder %v92, 0.0
    %v213 = vand.u32 %v92, 2147483648
    %v214 = vsel %vm212, %v213, %v211
    %v215 = vrsqrt.pop %v94
    %v216 = vmul.f32 %v215, %v94
    %v217 = vmul.f32 %v216, %v215
    %v218 = vmul.f32 0.5, %v217
    %v219 = vsub.f32 1.5, %v218
    %v220 = vmul.f32 %v215, %v219
    %v221 = vmul.f32 %v94, %v220
    %vm222 = vcmp.eq.f32.partialorder %v94, inf
    %v223 = vsel %vm222, %v94, %v221
    %vm224 = vcmp.eq.f32.partialorder %v94, 0.0
    %v225 = vand.u32 %v94, 2147483648
    %v226 = vsel %vm224, %v225, %v223
    %v227 = vrsqrt.pop %v96
    %v228 = vmul.f32 %v227, %v96
    %v229 = vmul.f32 %v228, %v227
    %v230 = vmul.f32 0.5, %v229
    %v231 = vsub.f32 1.5, %v230
    %v232 = vmul.f32 %v227, %v231
    %v233 = vmul.f32 %v96, %v232
    %vm234 = vcmp.eq.f32.partialorder %v96, inf
    %v235 = vsel %vm234, %v96, %v233
    %vm236 = vcmp.eq.f32.partialorder %v96, 0.0
    %v237 = vand.u32 %v96, 2147483648
    %v238 = vsel %vm236, %v237, %v235
    %v239 = vrsqrt.pop %v98
    %v240 = vmul.f32 %v239, %v98
    %v241 = vmul.f32 %v240, %v239
    %v242 = vmul.f32 0.5, %v241
    %v243 = vsub.f32 1.5, %v242
    %v244 = vmul.f32 %v239, %v243
    %v245 = vmul.f32 %v98, %v244
    %vm246 = vcmp.eq.f32.partialorder %v98, inf
    %v247 = vsel %vm246, %v98, %v245
    %vm248 = vcmp.eq.f32.partialorder %v98, 0.0
    %v249 = vand.u32 %v98, 2147483648
    %v250 = vsel %vm248, %v249, %v247
    %v251 = vrsqrt.pop %v100
    %v252 = vmul.f32 %v251, %v100
    %v253 = vmul.f32 %v252, %v251
    %v254 = vmul.f32 0.5, %v253
    %v255 = vsub.f32 1.5, %v254
    %v256 = vmul.f32 %v251, %v255
    %v257 = vmul.f32 %v100, %v256
    %vm258 = vcmp.eq.f32.partialorder %v100, inf
    %v259 = vsel %vm258, %v100, %v257
    %vm260 = vcmp.eq.f32.partialorder %v100, 0.0
    %v261 = vand.u32 %v100, 2147483648
    %v262 = vsel %vm260, %v261, %v259
    %v263 = vrsqrt.pop %v102
    %v264 = vmul.f32 %v263, %v102
    %v265 = vmul.f32 %v264, %v263
    %v266 = vmul.f32 0.5, %v265
    %v267 = vsub.f32 1.5, %v266
    %v268 = vmul.f32 %v263, %v267
    %v269 = vmul.f32 %v102, %v268
    %vm270 = vcmp.eq.f32.partialorder %v102, inf
    %v271 = vsel %vm270, %v102, %v269
    %vm272 = vcmp.eq.f32.partialorder %v102, 0.0
    %v273 = vand.u32 %v102, 2147483648
    %v274 = vsel %vm272, %v273, %v271
    %v275 = vrsqrt.pop %v104
    %v276 = vmul.f32 %v275, %v104
    %v277 = vmul.f32 %v276, %v275
    %v278 = vmul.f32 0.5, %v277
    %v279 = vsub.f32 1.5, %v278
    %v280 = vmul.f32 %v275, %v279
    %v281 = vmul.f32 %v104, %v280
    %vm282 = vcmp.eq.f32.partialorder %v104, inf
    %v283 = vsel %vm282, %v104, %v281
    %vm284 = vcmp.eq.f32.partialorder %v104, 0.0
    %v285 = vand.u32 %v104, 2147483648
    %v286 = vsel %vm284, %v285, %v283
    %v287 = vrsqrt.pop %v106
    %v288 = vmul.f32 %v287, %v106
    %v289 = vmul.f32 %v288, %v287
    %v290 = vmul.f32 0.5, %v289
    %v291 = vsub.f32 1.5, %v290
    %v292 = vmul.f32 %v287, %v291
    %v293 = vmul.f32 %v106, %v292
    %vm294 = vcmp.eq.f32.partialorder %v106, inf
    %v295 = vsel %vm294, %v106, %v293
    %vm296 = vcmp.eq.f32.partialorder %v106, 0.0
    %v297 = vand.u32 %v106, 2147483648
    %v298 = vsel %vm296, %v297, %v295
    %v299 = vmax.f32 %v118, 1e-12
    %v300 = vmax.f32 %v130, 1e-12
    %v301 = vmax.f32 %v142, 1e-12
    %v302 = vmax.f32 %v154, 1e-12
    %v303 = vmax.f32 %v166, 1e-12
    %v304 = vmax.f32 %v178, 1e-12
    %v305 = vmax.f32 %v190, 1e-12
    %v306 = vmax.f32 %v202, 1e-12
    %v307 = vmax.f32 %v214, 1e-12
    %v308 = vmax.f32 %v226, 1e-12
    %v309 = vmax.f32 %v238, 1e-12
    %v310 = vmax.f32 %v250, 1e-12
    %v311 = vmax.f32 %v262, 1e-12
    %v312 = vmax.f32 %v274, 1e-12
    %v313 = vmax.f32 %v286, 1e-12
    %v314 = vmax.f32 %v298, 1e-12
    %v315 = vrcp.pop %v299
    %v316 = vmul.f32 %v299, %v315
    %v317 = vsub.f32 1.0, %v316
    %v318 = vmul.f32 %v315, %v317
    %v319 = vadd.f32 %v315, %v318
    %vm320 = vweird.f32 %v299
    %vm321 = vweird.f32 %v315
    %vm322 = vmor %vm320, %vm321
    %v323 = vsel %vm322, %v315, %v319
    %v324 = vand.u32 2147483647, %v299
    %vm325 = vcmp.eq.f32.partialorder %v324, 8.507059e+37
    %v326 = vand.u32 %v299, 2147483648
    %v327 = vor.u32 1.1754944e-38, %v326
    %v328 = vsel %vm325, %v327, %v323
    %v329 = vmul.f32 1.0, %v328
    %v330 = vrcp.pop %v300
    %v331 = vmul.f32 %v300, %v330
    %v332 = vsub.f32 1.0, %v331
    %v333 = vmul.f32 %v330, %v332
    %v334 = vadd.f32 %v330, %v333
    %vm335 = vweird.f32 %v300
    %vm336 = vweird.f32 %v330
    %vm337 = vmor %vm335, %vm336
    %v338 = vsel %vm337, %v330, %v334
    %v339 = vand.u32 2147483647, %v300
    %vm340 = vcmp.eq.f32.partialorder %v339, 8.507059e+37
    %v341 = vand.u32 %v300, 2147483648
    %v342 = vor.u32 1.1754944e-38, %v341
    %v343 = vsel %vm340, %v342, %v338
    %v344 = vmul.f32 1.0, %v343
    %v345 = vrcp.pop %v301
    %v346 = vmul.f32 %v301, %v345
    %v347 = vsub.f32 1.0, %v346
    %v348 = vmul.f32 %v345, %v347
    %v349 = vadd.f32 %v345, %v348
    %vm350 = vweird.f32 %v301
    %vm351 = vweird.f32 %v345
    %vm352 = vmor %vm350, %vm351
    %v353 = vsel %vm352, %v345, %v349
    %v354 = vand.u32 2147483647, %v301
    %vm355 = vcmp.eq.f32.partialorder %v354, 8.507059e+37
    %v356 = vand.u32 %v301, 2147483648
    %v357 = vor.u32 1.1754944e-38, %v356
    %v358 = vsel %vm355, %v357, %v353
    %v359 = vmul.f32 1.0, %v358
    %v360 = vrcp.pop %v302
    %v361 = vmul.f32 %v302, %v360
    %v362 = vsub.f32 1.0, %v361
    %v363 = vmul.f32 %v360, %v362
    %v364 = vadd.f32 %v360, %v363
    %vm365 = vweird.f32 %v302
    %vm366 = vweird.f32 %v360
    %vm367 = vmor %vm365, %vm366
    %v368 = vsel %vm367, %v360, %v364
    %v369 = vand.u32 2147483647, %v302
    %vm370 = vcmp.eq.f32.partialorder %v369, 8.507059e+37
    %v371 = vand.u32 %v302, 2147483648
    %v372 = vor.u32 1.1754944e-38, %v371
    %v373 = vsel %vm370, %v372, %v368
    %v374 = vmul.f32 1.0, %v373
    %v375 = vrcp.pop %v303
    %v376 = vmul.f32 %v303, %v375
    %v377 = vsub.f32 1.0, %v376
    %v378 = vmul.f32 %v375, %v377
    %v379 = vadd.f32 %v375, %v378
    %vm380 = vweird.f32 %v303
    %vm381 = vweird.f32 %v375
    %vm382 = vmor %vm380, %vm381
    %v383 = vsel %vm382, %v375, %v379
    %v384 = vand.u32 2147483647, %v303
    %vm385 = vcmp.eq.f32.partialorder %v384, 8.507059e+37
    %v386 = vand.u32 %v303, 2147483648
    %v387 = vor.u32 1.1754944e-38, %v386
    %v388 = vsel %vm385, %v387, %v383
    %v389 = vmul.f32 1.0, %v388
    %v390 = vrcp.pop %v304
    %v391 = vmul.f32 %v304, %v390
    %v392 = vsub.f32 1.0, %v391
    %v393 = vmul.f32 %v390, %v392
    %v394 = vadd.f32 %v390, %v393
    %vm395 = vweird.f32 %v304
    %vm396 = vweird.f32 %v390
    %vm397 = vmor %vm395, %vm396
    %v398 = vsel %vm397, %v390, %v394
    %v399 = vand.u32 2147483647, %v304
    %vm400 = vcmp.eq.f32.partialorder %v399, 8.507059e+37
    %v401 = vand.u32 %v304, 2147483648
    %v402 = vor.u32 1.1754944e-38, %v401
    %v403 = vsel %vm400, %v402, %v398
    %v404 = vmul.f32 1.0, %v403
    %v405 = vrcp.pop %v305
    %v406 = vmul.f32 %v305, %v405
    %v407 = vsub.f32 1.0, %v406
    %v408 = vmul.f32 %v405, %v407
    %v409 = vadd.f32 %v405, %v408
    %vm410 = vweird.f32 %v305
    %vm411 = vweird.f32 %v405
    %vm412 = vmor %vm410, %vm411
    %v413 = vsel %vm412, %v405, %v409
    %v414 = vand.u32 2147483647, %v305
    %vm415 = vcmp.eq.f32.partialorder %v414, 8.507059e+37
    %v416 = vand.u32 %v305, 2147483648
    %v417 = vor.u32 1.1754944e-38, %v416
    %v418 = vsel %vm415, %v417, %v413
    %v419 = vmul.f32 1.0, %v418
    %v420 = vrcp.pop %v306
    %v421 = vmul.f32 %v306, %v420
    %v422 = vsub.f32 1.0, %v421
    %v423 = vmul.f32 %v420, %v422
    %v424 = vadd.f32 %v420, %v423
    %vm425 = vweird.f32 %v306
    %vm426 = vweird.f32 %v420
    %vm427 = vmor %vm425, %vm426
    %v428 = vsel %vm427, %v420, %v424
    %v429 = vand.u32 2147483647, %v306
    %vm430 = vcmp.eq.f32.partialorder %v429, 8.507059e+37
    %v431 = vand.u32 %v306, 2147483648
    %v432 = vor.u32 1.1754944e-38, %v431
    %v433 = vsel %vm430, %v432, %v428
    %v434 = vmul.f32 1.0, %v433
    %v435 = vrcp.pop %v307
    %v436 = vmul.f32 %v307, %v435
    %v437 = vsub.f32 1.0, %v436
    %v438 = vmul.f32 %v435, %v437
    %v439 = vadd.f32 %v435, %v438
    %vm440 = vweird.f32 %v307
    %vm441 = vweird.f32 %v435
    %vm442 = vmor %vm440, %vm441
    %v443 = vsel %vm442, %v435, %v439
    %v444 = vand.u32 2147483647, %v307
    %vm445 = vcmp.eq.f32.partialorder %v444, 8.507059e+37
    %v446 = vand.u32 %v307, 2147483648
    %v447 = vor.u32 1.1754944e-38, %v446
    %v448 = vsel %vm445, %v447, %v443
    %v449 = vmul.f32 1.0, %v448
    %v450 = vrcp.pop %v308
    %v451 = vmul.f32 %v308, %v450
    %v452 = vsub.f32 1.0, %v451
    %v453 = vmul.f32 %v450, %v452
    %v454 = vadd.f32 %v450, %v453
    %vm455 = vweird.f32 %v308
    %vm456 = vweird.f32 %v450
    %vm457 = vmor %vm455, %vm456
    %v458 = vsel %vm457, %v450, %v454
    %v459 = vand.u32 2147483647, %v308
    %vm460 = vcmp.eq.f32.partialorder %v459, 8.507059e+37
    %v461 = vand.u32 %v308, 2147483648
    %v462 = vor.u32 1.1754944e-38, %v461
    %v463 = vsel %vm460, %v462, %v458
    %v464 = vmul.f32 1.0, %v463
    %v465 = vrcp.pop %v309
    %v466 = vmul.f32 %v309, %v465
    %v467 = vsub.f32 1.0, %v466
    %v468 = vmul.f32 %v465, %v467
    %v469 = vadd.f32 %v465, %v468
    %vm470 = vweird.f32 %v309
    %vm471 = vweird.f32 %v465
    %vm472 = vmor %vm470, %vm471
    %v473 = vsel %vm472, %v465, %v469
    %v474 = vand.u32 2147483647, %v309
    %vm475 = vcmp.eq.f32.partialorder %v474, 8.507059e+37
    %v476 = vand.u32 %v309, 2147483648
    %v477 = vor.u32 1.1754944e-38, %v476
    %v478 = vsel %vm475, %v477, %v473
    %v479 = vmul.f32 1.0, %v478
    %v480 = vrcp.pop %v310
    %v481 = vmul.f32 %v310, %v480
    %v482 = vsub.f32 1.0, %v481
    %v483 = vmul.f32 %v480, %v482
    %v484 = vadd.f32 %v480, %v483
    %vm485 = vweird.f32 %v310
    %vm486 = vweird.f32 %v480
    %vm487 = vmor %vm485, %vm486
    %v488 = vsel %vm487, %v480, %v484
    %v489 = vand.u32 2147483647, %v310
    %vm490 = vcmp.eq.f32.partialorder %v489, 8.507059e+37
    %v491 = vand.u32 %v310, 2147483648
    %v492 = vor.u32 1.1754944e-38, %v491
    %v493 = vsel %vm490, %v492, %v488
    %v494 = vmul.f32 1.0, %v493
    %v495 = vrcp.pop %v311
    %v496 = vmul.f32 %v311, %v495
    %v497 = vsub.f32 1.0, %v496
    %v498 = vmul.f32 %v495, %v497
    %v499 = vadd.f32 %v495, %v498
    %vm500 = vweird.f32 %v311
    %vm501 = vweird.f32 %v495
    %vm502 = vmor %vm500, %vm501
    %v503 = vsel %vm502, %v495, %v499
    %v504 = vand.u32 2147483647, %v311
    %vm505 = vcmp.eq.f32.partialorder %v504, 8.507059e+37
    %v506 = vand.u32 %v311, 2147483648
    %v507 = vor.u32 1.1754944e-38, %v506
    %v508 = vsel %vm505, %v507, %v503
    %v509 = vmul.f32 1.0, %v508
    %v510 = vrcp.pop %v312
    %v511 = vmul.f32 %v312, %v510
    %v512 = vsub.f32 1.0, %v511
    %v513 = vmul.f32 %v510, %v512
    %v514 = vadd.f32 %v510, %v513
    %vm515 = vweird.f32 %v312
    %vm516 = vweird.f32 %v510
    %vm517 = vmor %vm515, %vm516
    %v518 = vsel %vm517, %v510, %v514
    %v519 = vand.u32 2147483647, %v312
    %vm520 = vcmp.eq.f32.partialorder %v519, 8.507059e+37
    %v521 = vand.u32 %v312, 2147483648
    %v522 = vor.u32 1.1754944e-38, %v521
    %v523 = vsel %vm520, %v522, %v518
    %v524 = vmul.f32 1.0, %v523
    %v525 = vrcp.pop %v313
    %v526 = vmul.f32 %v313, %v525
    %v527 = vsub.f32 1.0, %v526
    %v528 = vmul.f32 %v525, %v527
    %v529 = vadd.f32 %v525, %v528
    %vm530 = vweird.f32 %v313
    %vm531 = vweird.f32 %v525
    %vm532 = vmor %vm530, %vm531
    %v533 = vsel %vm532, %v525, %v529
    %v534 = vand.u32 2147483647, %v313
    %vm535 = vcmp.eq.f32.partialorder %v534, 8.507059e+37
    %v536 = vand.u32 %v313, 2147483648
    %v537 = vor.u32 1.1754944e-38, %v536
    %v538 = vsel %vm535, %v537, %v533
    %v539 = vmul.f32 1.0, %v538
    %v540 = vrcp.pop %v314
    %v541 = vmul.f32 %v314, %v540
    %v542 = vsub.f32 1.0, %v541
    %v543 = vmul.f32 %v540, %v542
    %v544 = vadd.f32 %v540, %v543
    %vm545 = vweird.f32 %v314
    %vm546 = vweird.f32 %v540
    %vm547 = vmor %vm545, %vm546
    %v548 = vsel %vm547, %v540, %v544
    %v549 = vand.u32 2147483647, %v314
    %vm550 = vcmp.eq.f32.partialorder %v549, 8.507059e+37
    %v551 = vand.u32 %v314, 2147483648
    %v552 = vor.u32 1.1754944e-38, %v551
    %v553 = vsel %vm550, %v552, %v548
    %v554 = vmul.f32 1.0, %v553
    %v555 = vmul.f32 %v43, %v329
    %v556 = vmul.f32 %v44, %v344
    %v557 = vmul.f32 %v45, %v359
    %v558 = vmul.f32 %v46, %v374
    %v559 = vmul.f32 %v47, %v389
    %v560 = vmul.f32 %v48, %v404
    %v561 = vmul.f32 %v49, %v419
    %v562 = vmul.f32 %v50, %v434
    %v563 = vmul.f32 %v51, %v449
    %v564 = vmul.f32 %v52, %v464
    %v565 = vmul.f32 %v53, %v479
    %v566 = vmul.f32 %v54, %v494
    %v567 = vmul.f32 %v55, %v509
    %v568 = vmul.f32 %v56, %v524
    %v569 = vmul.f32 %v57, %v539
    %v570 = vmul.f32 %v58, %v554
    %571 = vmatpush.xpose.msra.mxu0 %v570
    %572 = vmatpush.xpose.msra.mxu0 %v569
    %573 = vmatpush.xpose.msra.mxu0 %v568
    %574 = vmatpush.xpose.msra.mxu0 %v567
    %575 = vmatpush.xpose.msra.mxu0 %v566
    %576 = vmatpush.xpose.msra.mxu0 %v565
    %577 = vmatpush.xpose.msra.mxu0 %v564
    %578 = vmatpush.xpose.msra.mxu0 %v563
    %579 = vmatpush.xpose.msra.mxu0 %v562
    %580 = vmatpush.xpose.msra.mxu0 %v561
    %581 = vmatpush.xpose.msra.mxu0 %v560
    %582 = vmatpush.xpose.msra.mxu0 %v559
    %583 = vmatpush.xpose.msra.mxu0 %v558
    %584 = vmatpush.xpose.msra.mxu0 %v557
    %585 = vmatpush.xpose.msra.mxu0 %v556
    %586 = vmatpush.xpose.msra.mxu0 %v555
    %587 = vmatmul.f32.gmra.mxu0 %v42
    %v588 = vpop.f32.mrf.mxu0
    %v589 = vadd.f32 0.0, %v588
    %590 = vdwg.mxu0
    %v591 = vmul.f32 %v42, %v42
    %592 = vadd.xlane.f32.xlu0 %v591
    %v593 = vpop.xlane.xlu0 %592
    %v594 = vrsqrt.pop %v593
    %v595 = vmul.f32 %v594, %v593
    %v596 = vmul.f32 %v595, %v594
    %v597 = vmul.f32 0.5, %v596
    %v598 = vsub.f32 1.5, %v597
    %v599 = vmul.f32 %v594, %v598
    %v600 = vmul.f32 %v593, %v599
    %vm601 = vcmp.eq.f32.partialorder %v593, inf
    %v602 = vsel %vm601, %v593, %v600
    %vm603 = vcmp.eq.f32.partialorder %v593, 0.0
    %v604 = vand.u32 %v593, 2147483648
    %v605 = vsel %vm603, %v604, %v602
    %v606 = vmax.f32 %v605, 1e-12
    %v607 = vrcp.pop %v606
    %v608 = vmul.f32 %v606, %v607
    %v609 = vsub.f32 1.0, %v608
    %v610 = vmul.f32 %v607, %v609
    %v611 = vadd.f32 %v607, %v610
    %vm612 = vweird.f32 %v606
    %vm613 = vweird.f32 %v607
    %vm614 = vmor %vm612, %vm613
    %v615 = vsel %vm614, %v607, %v611
    %v616 = vand.u32 2147483647, %v606
    %vm617 = vcmp.eq.f32.partialorder %v616, 8.507059e+37
    %v618 = vand.u32 %v606, 2147483648
    %v619 = vor.u32 1.1754944e-38, %v618
    %v620 = vsel %vm617, %v619, %v615
    %v621 = vmul.f32 1.0, %v620
    %v622 = vmul.f32 %v589, %v621
    %v623 = vmul.f32 %v622, 2.0
    %v624 = vsub.f32 2.0, %v623
    %v625 = vmax.f32 %v624, 0.0
    %v626 = vmin.f32 %v625, 4.0
    %v627 = vrsqrt.pop %v626
    %v628 = vmul.f32 %v627, %v626
    %v629 = vmul.f32 %v628, %v627
    %v630 = vmul.f32 0.5, %v629
    %v631 = vsub.f32 1.5, %v630
    %v632 = vmul.f32 %v627, %v631
    %v633 = vmul.f32 %v626, %v632
    %vm634 = vcmp.eq.f32.partialorder %v626, inf
    %v635 = vsel %vm634, %v626, %v633
    %vm636 = vcmp.eq.f32.partialorder %v626, 0.0
    %v637 = vand.u32 %v626, 2147483648
    %v638 = vsel %vm636, %v637, %v635
    %639 = vst [vmem:[#allocation7] sm:$0xff] %v638
    // Predicated region
    $region18: #{tpu_custom_call.1} parent=1 // pred_check
      _
    $region19: #{tpu_custom_call.1} parent=1 // pred_check_branch
      %641 = sbr.rel (0) target = $region21
    $region20: #{tpu_custom_call.1} parent=1 // pred_region
      %643 = vsyncadd [#allocation4], 0
      %s645 = sshll.u32 [#allocation7], 4
      %s646 = int_to_ptr.vmem [resolvable:$true] %s645
      %s647 = sshll.u32 %s2, 4
      %s648 = int_to_ptr.hbm [resolvable:$true] %s647
      %650 = dma.vmem_to_hbm [thread:$0]  %s646, 128, %s648, [#allocation4]
    $region21: #{tpu_custom_call.1} parent=1 // pred_fallthru
      _
    // Predicated region
    $region22: #{tpu_custom_call.1} parent=1 // pred_check
      _
    $region23: #{tpu_custom_call.1} parent=1 // pred_check_branch
      %652 = sbr.rel (0) target = $region25
    $region24: #{tpu_custom_call.1} parent=1 // pred_region
      %654 = dma.done [#allocation4], 128
    $region25: #{tpu_custom_call.1} parent=1 // pred_fallthru
      _
    %655 = vsyncpa [#allocation3], 1
    %656 = vsyncpa [#allocation6], 1
    %657 = vsyncpa [#allocation4], 1

</llo_original>
